<compile_context>
chip_gen: v7x
topology: tpu7x:2x2x1
jax: 0.10.0
libtpu: 0.0.40
codegen_flags: <defaults>
</compile_context>

<pallas_src>
import jax
import jax.numpy as jnp
from jax.experimental import pallas as pl
from jax.experimental.pallas import tpu as pltpu

_LANES = 128          # vreg lane width (last-dim tiling unit)
_SUBLANES = 8         # f32 sublane count (second-to-last-dim tiling unit)
_MAX_ROW_TILE = 8192  # rows per grid step -> 8192 x 128 f32 = 4 MiB / buffer
_SMALL_N = 8192       # below this a fused XLA elementwise op wins outright


def _round_up(x, m):
    return ((x + m - 1) // m) * m


def linear_kernel(x_ref, w_ref, b_ref, o_ref):
    # x_ref / o_ref: (block_rows, 128) f32 tile in VMEM (double-buffered).
    # w_ref / b_ref: (1, 1) scalars in SMEM; the scalar broadcasts across the
    # whole vreg for free on the VPU.
    o_ref[...] = x_ref[...] * w_ref[0, 0] + b_ref[0, 0]


def linear_forward(x, w, b):
    """Pallas forward of nn.Linear(1, 1).

    x: (N, 1) float32
    w: (1, 1) float32  (out_features, in_features)
    b: (1, 1) float32
    returns: (N, 1) float32
    """
    n, f = x.shape
    assert f == 1 and w.shape == (1, 1) and b.shape == (1, 1)

    # Fast path: for small N, and for lengths that are not a multiple of 128
    # (where the free lane-dense reshape below is unavailable), a single fused
    # XLA elementwise op is already HBM-optimal and avoids kernel launch cost
    # and any wrapper-side pad/slice copies.
    if n <= _SMALL_N or n % _LANES != 0:
        return x * w[0, 0] + b[0, 0]

    # Lane-dense (rows, 128) view of the flat column: pure bitcast, no copy.
    rows = n // _LANES
    x2d = x.reshape(rows, _LANES)

    # Split work over at least two grid steps (both TensorCores on v7x), with
    # blocks capped at 4 MiB so in+out double-buffering fits 16 MiB of VMEM.
    block_rows = min(
        _MAX_ROW_TILE,
        max(_SUBLANES, _round_up(pl.cdiv(rows, 2), _SUBLANES)),
    )
    # Partial last block (rows % block_rows != 0) is handled by Pallas:
    # padded reads, masked writes.
    grid = (pl.cdiv(rows, block_rows),)

    out2d = pl.pallas_call(
        linear_kernel,
        out_shape=jax.ShapeDtypeStruct((rows, _LANES), x.dtype),
        grid=grid,
        in_specs=[
            # Lane-dense input tile, auto double-buffered by Pallas.
            pl.BlockSpec((block_rows, _LANES), lambda i: (i, 0)),
            # Parameters live in SMEM as scalars (no padded VMEM tiles / DMA).
            pl.BlockSpec(memory_space=pltpu.MemorySpace.SMEM),
            pl.BlockSpec(memory_space=pltpu.MemorySpace.SMEM),
        ],
        out_specs=pl.BlockSpec((block_rows, _LANES), lambda i: (i, 0)),
        compiler_params=pltpu.CompilerParams(
            dimension_semantics=("parallel",),
            # Explicit so v5e's 16 MiB scoped-VMEM default does not cap the
            # 4 MiB x 4 double-buffered in/out tiles.
            vmem_limit_bytes=32 * 1024 * 1024,
        ),
        cost_estimate=pl.CostEstimate(
            flops=2 * n, transcendentals=0, bytes_accessed=8 * n + 8),
    )(x2d, w, b)

    # Free reshape back to the (N, 1) column layout (no slice, no copy).
    return out2d.reshape(n, 1)


if __name__ == "__main__":
    # Deterministic parameter init (matches PyTorch's U(-1/sqrt(fan_in),
    # 1/sqrt(fan_in)) with fan_in = 1 -> U(-1, 1)).
    key = jax.random.PRNGKey(0)
    kw, kb, kx = jax.random.split(key, 3)
    w = jax.random.uniform(kw, (1, 1), jnp.float32, minval=-1.0, maxval=1.0)
    b = jax.random.uniform(kb, (1, 1), jnp.float32, minval=-1.0, maxval=1.0)

    # 1) The original script's input: x = torch.linspace(1, 10, 50) as (50, 1).
    #    Takes the small-N fused-XLA fast path.
    x_demo = jnp.linspace(1.0, 10.0, 50, dtype=jnp.float32).reshape(50, 1)
    out_demo = jax.block_until_ready(linear_forward(x_demo, w, b))
    ref_demo = x_demo * w[0, 0] + b[0, 0]
    assert out_demo.shape == (50, 1)
    assert jnp.allclose(out_demo, ref_demo, atol=1e-6, rtol=1e-6)

    # 2) A larger input that exercises the Pallas kernel, including the
    #    masked partial last block (rows = 333, block_rows = 168, grid = 2).
    n_big = 333 * _LANES
    x_big = jax.random.normal(kx, (n_big, 1), jnp.float32)
    out_big = jax.block_until_ready(linear_forward(x_big, w, b))
    ref_big = x_big * w[0, 0] + b[0, 0]
    assert out_big.shape == (n_big, 1)
    assert jnp.allclose(out_big, ref_big, atol=1e-6, rtol=1e-6)

    print("KERNEL_OK")
</pallas_src>

<mosaic_0001>
module attributes {stable_mosaic.version = 11 : i64} {
  func.func @linear_kernel(%arg0: i32, %arg1: memref<168x128xf32, #tpu.memory_space<vmem>>, %arg2: memref<1x1xf32, #tpu.memory_space<smem>>, %arg3: memref<1x1xf32, #tpu.memory_space<smem>>, %arg4: memref<168x128xf32, #tpu.memory_space<vmem>>) attributes {dimension_semantics = [#tpu.dimension_semantics<parallel>], iteration_bounds = array<i64: 2>, scalar_prefetch = 0 : i64, scratch_operands = 0 : i64, tpu.core_type = #tpu.core_type<tc>, window_params = [{transform_indices = @transform_0, window_bounds = array<i64: 168, 128>}, {transform_indices = @transform_1, window_bounds = array<i64: 1, 1>}, {transform_indices = @transform_2, window_bounds = array<i64: 1, 1>}, {transform_indices = @transform_3, window_bounds = array<i64: 168, 128>}]} {
    %c0 = arith.constant 0 : index
    %c0_0 = arith.constant 0 : index
    %0 = vector.load %arg1[%c0, %c0_0] : memref<168x128xf32, #tpu.memory_space<vmem>>, vector<168x128xf32>
    %c0_1 = arith.constant 0 : index
    %c0_2 = arith.constant 0 : index
    %1 = memref.load %arg2[%c0_1, %c0_2] : memref<1x1xf32, #tpu.memory_space<smem>>
    %2 = vector.broadcast %1 : f32 to vector<168x128xf32>
    %3 = arith.mulf %0, %2 : vector<168x128xf32>
    %c0_3 = arith.constant 0 : index
    %c0_4 = arith.constant 0 : index
    %4 = memref.load %arg3[%c0_3, %c0_4] : memref<1x1xf32, #tpu.memory_space<smem>>
    %5 = vector.broadcast %4 : f32 to vector<168x128xf32>
    %6 = arith.addf %3, %5 : vector<168x128xf32>
    %c0_5 = arith.constant 0 : index
    %c0_6 = arith.constant 0 : index
    %7 = vector.load %arg4[%c0_5, %c0_6] : memref<168x128xf32, #tpu.memory_space<vmem>>, vector<168x128xf32>
    tpu.vector_store %arg4[%c0_5, %c0_6], %6 {strides = array<i32>} : memref<168x128xf32, #tpu.memory_space<vmem>>, vector<168x128xf32>,
    return
  }
  func.func @transform_0(%arg0: i32) -> (i32, i32) {
    %c0_i32 = arith.constant 0 : i32
    %c0_i32_0 = arith.constant 0 : i32
    return %arg0, %c0_i32 : i32, i32
  }
  func.func @transform_1(%arg0: i32) -> (i32, i32) {
    %c0_i32 = arith.constant 0 : i32
    %c0_i32_0 = arith.constant 0 : i32
    %c0_i32_1 = arith.constant 0 : i32
    return %c0_i32, %c0_i32_0 : i32, i32
  }
  func.func @transform_2(%arg0: i32) -> (i32, i32) {
    %c0_i32 = arith.constant 0 : i32
    %c0_i32_0 = arith.constant 0 : i32
    %c0_i32_1 = arith.constant 0 : i32
    return %c0_i32, %c0_i32_0 : i32, i32
  }
  func.func @transform_3(%arg0: i32) -> (i32, i32) {
    %c0_i32 = arith.constant 0 : i32
    %c0_i32_0 = arith.constant 0 : i32
    return %arg0, %c0_i32 : i32, i32
  }
}

</mosaic_0001>

<llo_original>
// kernel: tpu_custom_call.1
$region0: #{tpu_custom_call.1}
  #allocation0 [shape = 'u32[]', space=smem, size = 0x4, offset = 0x4, fixed_abs, tag = 'smem constant byte address 0x4 - core index']
  #allocation1 [shape = 'u32[144,128]{1,0:T(1,128)}', space=vmem, size = 0x12000, scoped, tag = 'internal scratch']
  #allocation2 [shape = 'f32[1,1]{1,0:T(1,128)S(6)}', space=smem, size = 0x200, scoped, tag = 'scoped memory for tpu_custom_call.1']
  #allocation3 [shape = 'f32[1,1]{1,0:T(1,128)S(6)}', space=smem, size = 0x200, scoped, tag = 'scoped memory for tpu_custom_call.1']
  %s0 = inlined_call_operand.hbm [shape: f32[333,128], index: 0, kind: input, shape index: {}]
  %s1 = inlined_call_operand.<no memory space> [shape: f32[1,1], index: 1, kind: input, shape index: {}]
  %s2 = inlined_call_operand.<no memory space> [shape: f32[1,1], index: 2, kind: input, shape index: {}]
  %s3 = inlined_call_operand.hbm [shape: f32[333,128], index: 3, kind: output, shape index: {}]
  %s4 = sld [smem:[#allocation0]]
  $region49: #{tpu_custom_call.1} parent=0
    _
  %s6 = ssub.s32 1, %s4
  %s7 = scalar_select 0, %s6, %s4
  %8 = sst [smem:[#allocation2]] %s1
  %9 = sst [smem:[#allocation3]] %s2
  $region1: #{tpu_custom_call.1} parent=0
    #allocation4 [shape = 'u8[172032]{0}', space=vmem, size = 0x2a000, scoped, tag = 'input window, operand 0']
    #allocation5 [shape = 's32[2]{0}', space=sflag, size = 0x8, scoped, tag = 'scoped memory for tpu_custom_call.1']
    #allocation6 [shape = 's32[2]{0}', space=sflag, size = 0x8, scoped, tag = 'scoped memory for tpu_custom_call.1']
    #allocation7 [shape = 'u8[172032]{0}', space=vmem, size = 0x2a000, scoped, tag = 'output window, operand 0']
    %10 = vsyncpa [#allocation5], 0
    %s11 = scalar_lea.sflag [#allocation5], 1
    %12 = vsyncpa %s11, 0
    %13 = vsyncpa [#allocation6], 0
    %s14 = scalar_lea.sflag [#allocation6], 1
    %15 = vsyncpa %s14, 0
    loop: start=0, step=1, limit=4
    $region2: #{tpu_custom_call.1} parent=1 // loop_pre_header
      _
    $region3: #{tpu_custom_call.1} parent=1 // loop_header
      %s17 = sphi 0, %s21
      %p18 = scmp.ge.s32.totalorder %s17, 4
      %s27 = sphi 0, %s29
      %s30 = sphi 0, %s27
      %s31 = sphi 0, %s30
      %s47 = sphi 0, %s31
      %s51 = sphi 0, %s51
      %s53 = sphi 0, %s51
      %s54 = sphi 0, %s53
      %s68 = sphi 0, %s54
      %s72 = sphi 0, %s72
      %s74 = sphi 0, %s72
      %s75 = sphi 0, %s74
      %s89 = sphi 0, %s75
      %s95 = sphi 0, %s97
      %s98 = sphi 0, %s95
      %s99 = sphi 0, %s98
      %s115 = sphi 0, %s99
    $region4: #{tpu_custom_call.1} parent=1 // loop_header_branch
      %20 = sbr.rel (%p18) target = $region8
    $region5: #{tpu_custom_call.1} parent=1 // loop_body
      %s22 = ssub.s32 %s17, 1
      %s23 = ssub.s32 %s17, 2
      %s24 = sadd.s32 %s17, 1
      %s25 = ssub.s32 %s17, %s24
      %p26 = scmp.eq.s32.totalorder %s25, 0
      %s28 = sadd.s32 %s27, 1
      %s29 = scalar_select %p26, %s27, %s28
      %p32 = pneg %p26
      %p33 = scmp.eq.s32.totalorder %s17, 1
      %p34 = por %p32, %p33
      %p35 = scmp.ne.s32.totalorder %s27, %s30
      %p36 = scmp.eq.s32.totalorder %s17, 0
      %p37 = por %p35, %p36
      %p38 = scmp.ne.s32.totalorder %s27, %s30
      %p39 = scmp.eq.s32.totalorder %s22, 1
      %p40 = por %p38, %p39
      %p41 = scmp.ne.s32.totalorder %s30, %s31
      %p42 = scmp.eq.s32.totalorder %s22, 0
      %p43 = por %p41, %p42
      %p44 = scmp.ne.s32.totalorder %s30, %s31
      %p45 = scmp.eq.s32.totalorder %s23, 1
      %p46 = por %p44, %p45
      %p48 = scmp.ne.s32.totalorder %s31, %s47
      %p49 = scmp.eq.s32.totalorder %s23, 0
      %p50 = por %p48, %p49
      %s52 = sadd.s32 %s51, 1
      %p55 = scmp.eq.s32.totalorder %s17, 1
      %p56 = scmp.ne.s32.totalorder %s51, %s53
      %p57 = scmp.eq.s32.totalorder %s17, 0
      %p58 = por %p56, %p57
      %p59 = scmp.ne.s32.totalorder %s51, %s53
      %p60 = scmp.eq.s32.totalorder %s22, 1
      %p61 = por %p59, %p60
      %p62 = scmp.ne.s32.totalorder %s53, %s54
      %p63 = scmp.eq.s32.totalorder %s22, 0
      %p64 = por %p62, %p63
      %p65 = scmp.ne.s32.totalorder %s53, %s54
      %p66 = scmp.eq.s32.totalorder %s23, 1
      %p67 = por %p65, %p66
      %p69 = scmp.ne.s32.totalorder %s54, %s68
      %p70 = scmp.eq.s32.totalorder %s23, 0
      %p71 = por %p69, %p70
      %s73 = sadd.s32 %s72, 1
      %p76 = scmp.eq.s32.totalorder %s17, 1
      %p77 = scmp.ne.s32.totalorder %s72, %s74
      %p78 = scmp.eq.s32.totalorder %s17, 0
      %p79 = por %p77, %p78
      %p80 = scmp.ne.s32.totalorder %s72, %s74
      %p81 = scmp.eq.s32.totalorder %s22, 1
      %p82 = por %p80, %p81
      %p83 = scmp.ne.s32.totalorder %s74, %s75
      %p84 = scmp.eq.s32.totalorder %s22, 0
      %p85 = por %p83, %p84
      %p86 = scmp.ne.s32.totalorder %s74, %s75
      %p87 = scmp.eq.s32.totalorder %s23, 1
      %p88 = por %p86, %p87
      %p90 = scmp.ne.s32.totalorder %s75, %s89
      %p91 = scmp.eq.s32.totalorder %s23, 0
      %p92 = por %p90, %p91
      %s93 = ssub.s32 %s17, %s24
      %p94 = scmp.eq.s32.totalorder %s93, 0
      %s96 = sadd.s32 %s95, 1
      %s97 = scalar_select %p94, %s95, %s96
      %p100 = pneg %p94
      %p101 = scmp.eq.s32.totalorder %s17, 1
      %p102 = por %p100, %p101
      %p103 = scmp.ne.s32.totalorder %s95, %s98
      %p104 = scmp.eq.s32.totalorder %s17, 0
      %p105 = por %p103, %p104
      %p106 = scmp.ne.s32.totalorder %s95, %s98
      %p107 = scmp.eq.s32.totalorder %s22, 1
      %p108 = por %p106, %p107
      %p109 = scmp.ne.s32.totalorder %s98, %s99
      %p110 = scmp.eq.s32.totalorder %s22, 0
      %p111 = por %p109, %p110
      %p112 = scmp.ne.s32.totalorder %s98, %s99
      %p113 = scmp.eq.s32.totalorder %s23, 1
      %p114 = por %p112, %p113
      %p116 = scmp.ne.s32.totalorder %s99, %s115
      %p117 = scmp.eq.s32.totalorder %s23, 0
      %p118 = por %p116, %p117
      %p119 = scmp.le.s32.totalorder 1, %s17
      %p120 = scmp.lt.s32.totalorder %s17, 3
      %p121 = pnand %p119, %p120
      %p122 = pneg %p121
      // Predicated region
      $region9: #{tpu_custom_call.1} parent=5 // pred_check
        _
      $region10: #{tpu_custom_call.1} parent=5 // pred_check_branch
        %124 = sbr.rel (%p121) target = $region12
      $region11: #{tpu_custom_call.1} parent=5 // pred_region
        %s125 = ssub.s32 %s17, 1
        // Predicated region
        $region13: #{tpu_custom_call.1} parent=11 // pred_check
          %p126 = pneg %p64
        $region14: #{tpu_custom_call.1} parent=11 // pred_check_branch
          %128 = sbr.rel (%p126) target = $region16
        $region15: #{tpu_custom_call.1} parent=11 // pred_region
          _
        $region16: #{tpu_custom_call.1} parent=11 // pred_fallthru
          _
        // Predicated region
        $region17: #{tpu_custom_call.1} parent=11 // pred_check
          %p129 = pneg %p85
        $region18: #{tpu_custom_call.1} parent=11 // pred_check_branch
          %131 = sbr.rel (%p129) target = $region20
        $region19: #{tpu_custom_call.1} parent=11 // pred_region
          _
        $region20: #{tpu_custom_call.1} parent=11 // pred_fallthru
          _
      $region12: #{tpu_custom_call.1} parent=5 // pred_fallthru
        _
      %p132 = scmp.lt.s32.totalorder %s17, 2
      // Predicated region
      $region21: #{tpu_custom_call.1} parent=5 // pred_check
        %p133 = pneg %p132
      $region22: #{tpu_custom_call.1} parent=5 // pred_check_branch
        %135 = sbr.rel (%p133) target = $region24
      $region23: #{tpu_custom_call.1} parent=5 // pred_region
        // Predicated region
        $region25: #{tpu_custom_call.1} parent=23 // pred_check
          %p136 = pneg %p37
        $region26: #{tpu_custom_call.1} parent=23 // pred_check_branch
          %138 = sbr.rel (%p136) target = $region28
        $region27: #{tpu_custom_call.1} parent=23 // pred_region
          %s139 = sand.u32 %s27, 1
          %s140 = scalar_lea.sflag [#allocation5], %s139
          %s141 = sand.u32 %s27, 1
          %s142 = smul.addr %s141, 168
          %s143 = scalar_lea.vmem [#allocation4], %s142
          %s144 = smul.u32 21, %s17
          %s146 = ssub.s32 2688, 2688
          %147 = vsyncadd %s140, %s146
          %s148 = smul.addr %s144, 128
          %s149 = scalar_lea.hbm %s0, %s148
          %s150 = sshll.u32 %s143, 4
          %s151 = int_to_ptr.vmem [resolvable:$true] %s150
          %156 = dma.hbm_to_vmem [thread:$0]  %s149, 2688, %s151, %s140, 128, 128, 8
        $region28: #{tpu_custom_call.1} parent=23 // pred_fallthru
          _
      $region24: #{tpu_custom_call.1} parent=5 // pred_fallthru
        _
      %p157 = scmp.le.s32.totalorder 1, %s17
      %p158 = scmp.lt.s32.totalorder %s17, 3
      %p159 = pnand %p157, %p158
      %p160 = pneg %p159
      // Predicated region
      $region29: #{tpu_custom_call.1} parent=5 // pred_check
        _
      $region30: #{tpu_custom_call.1} parent=5 // pred_check_branch
        %162 = sbr.rel (%p159) target = $region32
      $region31: #{tpu_custom_call.1} parent=5 // pred_region
        %s163 = ssub.s32 %s17, 1
        %s164 = sand.u32 %s30, 1
        %s165 = scalar_lea.sflag [#allocation5], %s164
        %s166 = sand.u32 %s30, 1
        %s167 = smul.addr %s166, 168
        %s168 = scalar_lea.vmem [#allocation4], %s167
        // Predicated region
        $region33: #{tpu_custom_call.1} parent=31 // pred_check
          %p169 = pneg %p43
        $region34: #{tpu_custom_call.1} parent=31 // pred_check_branch
          %171 = sbr.rel (%p169) target = $region36
        $region35: #{tpu_custom_call.1} parent=31 // pred_region
          %172 = dma.done %s165, 2688
        $region36: #{tpu_custom_call.1} parent=31 // pred_fallthru
          _
        %s173 = sand.u32 %s30, 1
        %s174 = scalar_lea.sflag [#allocation5], %s173
        %s175 = sand.u32 %s30, 1
        %s176 = smul.addr %s175, 168
        %s177 = scalar_lea.vmem [#allocation4], %s176
        %p178 = pneg %p43
        %p179 = pneg %p40
        %p180 = pneg %p64
        %p181 = pneg %p61
        %p182 = pneg %p85
        %p183 = pneg %p82
        %p184 = pneg %p111
        %p185 = pneg %p108
        %s186 = sand.u32 %s98, 1
        %s187 = scalar_lea.sflag [#allocation6], %s186
        %s188 = sand.u32 %s98, 1
        %s189 = smul.addr %s188, 168
        %s190 = scalar_lea.vmem [#allocation7], %s189
        %s191 = smul.u32 21, %s22
        %s192 = smul.u32 21, %s22
        %v193 = vld [vmem:[%s168] sm:$0xff]
        %v194 = vld [vmem:[%s168 + $0x8] sm:$0xff]
        %v195 = vld [vmem:[%s168 + $0x10] sm:$0xff]
        %v196 = vld [vmem:[%s168 + $0x18] sm:$0xff]
        %v197 = vld [vmem:[%s168 + $0x20] sm:$0xff]
        %v198 = vld [vmem:[%s168 + $0x28] sm:$0xff]
        %v199 = vld [vmem:[%s168 + $0x30] sm:$0xff]
        %v200 = vld [vmem:[%s168 + $0x38] sm:$0xff]
        %v201 = vld [vmem:[%s168 + $0x40] sm:$0xff]
        %v202 = vld [vmem:[%s168 + $0x48] sm:$0xff]
        %v203 = vld [vmem:[%s168 + $0x50] sm:$0xff]
        %v204 = vld [vmem:[%s168 + $0x58] sm:$0xff]
        %v205 = vld [vmem:[%s168 + $0x60] sm:$0xff]
        %v206 = vld [vmem:[%s168 + $0x68] sm:$0xff]
        %v207 = vld [vmem:[%s168 + $0x70] sm:$0xff]
        %v208 = vld [vmem:[%s168 + $0x78] sm:$0xff]
        %v209 = vld [vmem:[%s168 + $0x80] sm:$0xff]
        %v210 = vld [vmem:[%s168 + $0x88] sm:$0xff]
        %v211 = vld [vmem:[%s168 + $0x90] sm:$0xff]
        %v212 = vld [vmem:[%s168 + $0x98] sm:$0xff]
        %v213 = vld [vmem:[%s168 + $0xa0] sm:$0xff]
        %s214 = sld [smem:[#allocation2]]
        %v215 = vstv %s214
        %v216 = vmul.f32 %v193, %v215
        %v217 = vmul.f32 %v194, %v215
        %v218 = vmul.f32 %v195, %v215
        %v219 = vmul.f32 %v196, %v215
        %v220 = vmul.f32 %v197, %v215
        %v221 = vmul.f32 %v198, %v215
        %v222 = vmul.f32 %v199, %v215
        %v223 = vmul.f32 %v200, %v215
        %v224 = vmul.f32 %v201, %v215
        %v225 = vmul.f32 %v202, %v215
        %v226 = vmul.f32 %v203, %v215
        %v227 = vmul.f32 %v204, %v215
        %v228 = vmul.f32 %v205, %v215
        %v229 = vmul.f32 %v206, %v215
        %v230 = vmul.f32 %v207, %v215
        %v231 = vmul.f32 %v208, %v215
        %v232 = vmul.f32 %v209, %v215
        %v233 = vmul.f32 %v210, %v215
        %v234 = vmul.f32 %v211, %v215
        %v235 = vmul.f32 %v212, %v215
        %v236 = vmul.f32 %v213, %v215
        %s237 = sld [smem:[#allocation3]]
        %v238 = vstv %s237
        %v239 = vadd.f32 %v216, %v238
        %v240 = vadd.f32 %v217, %v238
        %v241 = vadd.f32 %v218, %v238
        %v242 = vadd.f32 %v219, %v238
        %v243 = vadd.f32 %v220, %v238
        %v244 = vadd.f32 %v221, %v238
        %v245 = vadd.f32 %v222, %v238
        %v246 = vadd.f32 %v223, %v238
        %v247 = vadd.f32 %v224, %v238
        %v248 = vadd.f32 %v225, %v238
        %v249 = vadd.f32 %v226, %v238
        %v250 = vadd.f32 %v227, %v238
        %v251 = vadd.f32 %v228, %v238
        %v252 = vadd.f32 %v229, %v238
        %v253 = vadd.f32 %v230, %v238
        %v254 = vadd.f32 %v231, %v238
        %v255 = vadd.f32 %v232, %v238
        %v256 = vadd.f32 %v233, %v238
        %v257 = vadd.f32 %v234, %v238
        %v258 = vadd.f32 %v235, %v238
        %v259 = vadd.f32 %v236, %v238
        %260 = vst [vmem:[%s190] sm:$0xff] %v239
        %261 = vst [vmem:[%s190 + $0x8] sm:$0xff] %v240
        %262 = vst [vmem:[%s190 + $0x10] sm:$0xff] %v241
        %263 = vst [vmem:[%s190 + $0x18] sm:$0xff] %v242
        %264 = vst [vmem:[%s190 + $0x20] sm:$0xff] %v243
        %265 = vst [vmem:[%s190 + $0x28] sm:$0xff] %v244
        %266 = vst [vmem:[%s190 + $0x30] sm:$0xff] %v245
        %267 = vst [vmem:[%s190 + $0x38] sm:$0xff] %v246
        %268 = vst [vmem:[%s190 + $0x40] sm:$0xff] %v247
        %269 = vst [vmem:[%s190 + $0x48] sm:$0xff] %v248
        %270 = vst [vmem:[%s190 + $0x50] sm:$0xff] %v249
        %271 = vst [vmem:[%s190 + $0x58] sm:$0xff] %v250
        %272 = vst [vmem:[%s190 + $0x60] sm:$0xff] %v251
        %273 = vst [vmem:[%s190 + $0x68] sm:$0xff] %v252
        %274 = vst [vmem:[%s190 + $0x70] sm:$0xff] %v253
        %275 = vst [vmem:[%s190 + $0x78] sm:$0xff] %v254
        %276 = vst [vmem:[%s190 + $0x80] sm:$0xff] %v255
        %277 = vst [vmem:[%s190 + $0x88] sm:$0xff] %v256
        %278 = vst [vmem:[%s190 + $0x90] sm:$0xff] %v257
        %279 = vst [vmem:[%s190 + $0x98] sm:$0xff] %v258
        %280 = vst [vmem:[%s190 + $0xa0] sm:$0xff] %v259
        %s281 = sand.u32 %s98, 1
        %s282 = scalar_lea.sflag [#allocation6], %s281
        %s283 = sand.u32 %s98, 1
        %s284 = smul.addr %s283, 168
        %s285 = scalar_lea.vmem [#allocation7], %s284
        // Predicated region
        $region37: #{tpu_custom_call.1} parent=31 // pred_check
          %p286 = pneg %p108
        $region38: #{tpu_custom_call.1} parent=31 // pred_check_branch
          %288 = sbr.rel (%p286) target = $region40
        $region39: #{tpu_custom_call.1} parent=31 // pred_region
          %s289 = smul.u32 21, %s22
          %s291 = ssub.s32 2688, 2688
          %292 = vsyncadd %s282, %s291
          %s293 = smul.addr %s289, 128
          %s294 = scalar_lea.hbm %s3, %s293
          %s295 = sshll.u32 %s285, 4
          %s296 = int_to_ptr.vmem [resolvable:$true] %s295
          %301 = dma.vmem_to_hbm [thread:$0]  %s296, 2688, %s294, %s282, 128, 128, 8
        $region40: #{tpu_custom_call.1} parent=31 // pred_fallthru
          _
      $region32: #{tpu_custom_call.1} parent=5 // pred_fallthru
        _
      %p302 = scmp.le.s32.totalorder 2, %s17
      // Predicated region
      $region41: #{tpu_custom_call.1} parent=5 // pred_check
        %p303 = pneg %p302
      $region42: #{tpu_custom_call.1} parent=5 // pred_check_branch
        %305 = sbr.rel (%p303) target = $region44
      $region43: #{tpu_custom_call.1} parent=5 // pred_region
        %s306 = ssub.s32 %s17, 2
        // Predicated region
        $region45: #{tpu_custom_call.1} parent=43 // pred_check
          %p307 = pneg %p114
        $region46: #{tpu_custom_call.1} parent=43 // pred_check_branch
          %309 = sbr.rel (%p307) target = $region48
        $region47: #{tpu_custom_call.1} parent=43 // pred_region
          %s310 = sand.u32 %s99, 1
          %s311 = scalar_lea.sflag [#allocation6], %s310
          %s312 = sand.u32 %s99, 1
          %s313 = smul.addr %s312, 168
          %s314 = scalar_lea.vmem [#allocation7], %s313
          %315 = dma.done %s311, 2688
        $region48: #{tpu_custom_call.1} parent=43 // pred_fallthru
          _
      $region44: #{tpu_custom_call.1} parent=5 // pred_fallthru
        _
    $region6: #{tpu_custom_call.1} parent=1 // loop_footer
      %s21 = sadd.s32 1, %s17
    $region7: #{tpu_custom_call.1} parent=1 // loop_footer_branch
      %16 = sbr.rel target = $region3
    $region8: #{tpu_custom_call.1} parent=1 // loop_exit
      _
    %316 = vsyncpa [#allocation5], 1
    %s317 = scalar_lea.sflag [#allocation5], 1
    %318 = vsyncpa %s317, 1
    %319 = vsyncpa [#allocation6], 1
    %s320 = scalar_lea.sflag [#allocation6], 1
    %321 = vsyncpa %s320, 1

</llo_original>
